<compile_context>
chip_gen: v5e
topology: v5e:2x2
jax: 0.10.0
libtpu: 0.0.40
codegen_flags: <defaults>
</compile_context>

<pallas_src>
import numpy as np
import jax
import jax.numpy as jnp
from jax.experimental import pallas as pl
from jax.experimental.pallas import tpu as pltpu


def _round_up(x: int, m: int) -> int:
    return ((x + m - 1) // m) * m


# --------------------------------------------------------------------------
# Kernel
# --------------------------------------------------------------------------
def _make_mlp_kernel(num_layers: int):
    """Kernel computing the full MLP for one batch tile."""

    def kernel(x_ref, *refs):
        # refs = (w0, b0, w1, b1, ..., w_{L-1}, b_{L-1}, out_ref)
        out_ref = refs[-1]
        params = refs[:-1]
        # f32 input DMA'd straight from HBM; cast to bf16 on the VPU in-kernel
        # (halves input HBM traffic vs. a wrapper-side convert pass).
        h = x_ref[...].astype(jnp.bfloat16)
        for i in range(num_layers):
            w = params[2 * i][...]           # bf16 [in_pad, out_pad]
            b = params[2 * i + 1][...]       # f32  [1, out_pad]
            acc = jnp.dot(h, w, preferred_element_type=jnp.float32) + b
            if i < num_layers - 1:
                acc = jnp.maximum(acc, 0.0)          # ReLU between hidden layers (f32 VPU)
                h = acc.astype(jnp.bfloat16)         # back to bf16 for the next MXU pass
            else:
                h = acc                              # final layer stays f32
        out_ref[...] = h.astype(out_ref.dtype)

    return kernel


# --------------------------------------------------------------------------
# One-time parameter preparation (hoisted out of the per-call path)
# --------------------------------------------------------------------------
def prepare_prober_params(weights, biases):
    """Pads every layer's out-features to a multiple of 128 (lane-dense
    activations, unmasked stores) with matching zero rows added to the next
    layer's weight so the math is unchanged, and casts weights to bf16 / biases
    to f32. Returns (weights_bf16, biases_f32, out_dim)."""
    out_dim = int(weights[-1].shape[1])
    prepped_w, prepped_b = [], []
    extra_rows = 0                       # zero rows carried from previous layer's pad
    for w, b in zip(weights, biases):
        w = jnp.asarray(w, jnp.float32)
        b = jnp.asarray(b, jnp.float32).reshape(1, -1)
        out_i = w.shape[1]
        out_pad = max(128, _round_up(out_i, 128))
        if extra_rows:
            w = jnp.pad(w, ((0, extra_rows), (0, 0)))          # zero rows -> no effect
        if out_pad != out_i:
            w = jnp.pad(w, ((0, 0), (0, out_pad - out_i)))      # zero cols -> zero output
            b = jnp.pad(b, ((0, 0), (0, out_pad - out_i)))
        prepped_w.append(w.astype(jnp.bfloat16))
        prepped_b.append(b.astype(jnp.float32))
        extra_rows = out_pad - out_i
    return prepped_w, prepped_b, out_dim


# --------------------------------------------------------------------------
# Tiling / VMEM helpers
# --------------------------------------------------------------------------
def _choose_batch_tile(B: int, max_tile: int = 512) -> int:
    """Large tiles amortize per-grid-step overhead; keep >=2 grid steps when the
    batch is big enough so both v7x TensorCores get work over the 'parallel'
    grid axis. Tile is always a multiple of 8 (sublane alignment)."""
    B = max(B, 1)
    num_steps = max(-(-B // max_tile), 2 if B >= 16 else 1)
    return min(max_tile, _round_up(-(-B // num_steps), 8))


def _physical_vmem_cap_bytes() -> int:
    try:
        return int(pltpu.get_tpu_info().vmem_capacity_bytes)
    except Exception:
        return 64 * 1024 * 1024          # v7x has the smallest per-TC VMEM


def _vmem_limit_bytes(batch_tile, emb, weights_bf, biases_f32, out_pad):
    """Rough VMEM budget: double-buffered I/O tiles + parameter set + headroom,
    clamped to a generation-aware fraction of physical VMEM."""
    act_in = 2 * batch_tile * emb * 4                 # 2x f32 input tiles
    act_out = 2 * batch_tile * out_pad * 4            # 2x f32 output tiles
    params = sum(2 * int(np.prod(w.shape)) * 2 for w in weights_bf) \
           + sum(2 * int(np.prod(b.shape)) * 4 for b in biases_f32)
    widest = max([out_pad, emb] + [int(w.shape[1]) for w in weights_bf])
    scratch = 4 * batch_tile * widest * 4             # intermediate activations, generous
    need = act_in + act_out + params + scratch
    cap = _physical_vmem_cap_bytes() * 3 // 4         # leave headroom under the physical cap
    return int(min(max(2 * need, 16 * 1024 * 1024), cap))


# --------------------------------------------------------------------------
# Forward
# --------------------------------------------------------------------------
def prober_forward(e, weights_bf, biases_f32, out_dim, *, max_batch_tile: int = 512):
    """Runs the fused MLP Pallas kernel.

    e          : [B, embedding] float32 (kept f32; bf16 cast happens in-kernel)
    weights_bf : prepared bf16 weights [in_pad_i, out_pad_i] (from prepare_prober_params)
    biases_f32 : prepared f32 biases [1, out_pad_i]
    out_dim    : true (unpadded) output dimension
    returns    : [B, out_dim] float32
    """
    B, emb = e.shape
    num_layers = len(weights_bf)
    out_pad = int(weights_bf[-1].shape[1])

    batch_tile = _choose_batch_tile(B, max_batch_tile)
    B_pad = _round_up(max(B, 1), batch_tile)

    e_f32 = e.astype(jnp.float32)
    if B_pad != B:
        # Pad is at most (batch_tile - 1) rows; padded rows are discarded below.
        e_f32 = jnp.pad(e_f32, ((0, B_pad - B), (0, 0)))

    grid = (B_pad // batch_tile,)

    in_specs = [pl.BlockSpec((batch_tile, emb), lambda i: (i, 0))]
    flat_params = []
    for w, b in zip(weights_bf, biases_f32):
        # Grid-invariant full-array blocks: same block index every step, so the
        # pipeline only DMAs them once.
        # TODO(synk): single-buffer these via pipeline_mode=pl.Buffered(1) once
        # that path is validated; double-buffering is negligible at these sizes.
        in_specs.append(pl.BlockSpec(w.shape, lambda i: (0, 0)))
        in_specs.append(pl.BlockSpec(b.shape, lambda i: (0, 0)))
        flat_params.extend([w, b])

    out_specs = pl.BlockSpec((batch_tile, out_pad), lambda i: (i, 0))

    vmem_limit = _vmem_limit_bytes(batch_tile, emb, weights_bf, biases_f32, out_pad)

    out = pl.pallas_call(
        _make_mlp_kernel(num_layers),
        out_shape=jax.ShapeDtypeStruct((B_pad, out_pad), jnp.float32),
        grid=grid,
        in_specs=in_specs,
        out_specs=out_specs,
        compiler_params=pltpu.CompilerParams(
            dimension_semantics=("parallel",),
            vmem_limit_bytes=vmem_limit),
    )(e_f32, *flat_params)

    return out[:B, :out_dim]


# --------------------------------------------------------------------------
# Parameter init + pure-JAX reference
# --------------------------------------------------------------------------
def init_prober_params(key, embedding: int, arch: str, output_shape):
    """Deterministic init mimicking torch.nn.Linear's default U(-1/sqrt(fan_in), +1/sqrt(fan_in))."""
    output_dim = int(np.prod(output_shape))
    arch_list = list(map(int, arch.split('-'))) if arch != '' else []
    f = [embedding] + arch_list + [output_dim]

    weights, biases = [], []
    for i in range(len(f) - 1):
        fan_in, fan_out = f[i], f[i + 1]
        key, kw, kb = jax.random.split(key, 3)
        bound = 1.0 / np.sqrt(fan_in)
        # Stored as [in, out] (transposed relative to PyTorch's [out, in]).
        w = jax.random.uniform(kw, (fan_in, fan_out), jnp.float32, -bound, bound)
        b = jax.random.uniform(kb, (1, fan_out), jnp.float32, -bound, bound)
        weights.append(w)
        biases.append(b)
    return weights, biases


def prober_reference(e, weights, biases):
    """Pure-JAX f32 reference for correctness checking (original, unpadded params)."""
    h = e
    for i, (w, b) in enumerate(zip(weights, biases)):
        h = h @ w + b
        if i < len(weights) - 1:
            h = jnp.maximum(h, 0.0)
    return h


if __name__ == "__main__":
    embedding = 32
    arch = "64-32"
    output_shape = [2, 2]   # -> output_dim = 4

    key = jax.random.PRNGKey(0)
    key, ke1, ke2 = jax.random.split(key, 3)
    weights, biases = init_prober_params(key, embedding, arch, output_shape)
    out_dim = int(np.prod(output_shape))

    # One-time parameter prep (bf16 cast + lane padding) hoisted out of forward.
    w_prep, b_prep, out_dim_p = prepare_prober_params(weights, biases)
    assert out_dim_p == out_dim

    # Case 1: batch splits into 2 parallel tiles (feeds both v7x TensorCores).
    batch1 = 256
    e1 = jax.random.normal(ke1, (batch1, embedding), dtype=jnp.float32)
    out1 = jax.block_until_ready(prober_forward(e1, w_prep, b_prep, out_dim))
    ref1 = prober_reference(e1, weights, biases)
    assert out1.shape == (batch1, out_dim)
    np.testing.assert_allclose(np.asarray(out1), np.asarray(ref1), rtol=3e-2, atol=3e-2)

    # Case 2: small, non-divisible batch -> exercises the batch-padding path.
    batch2 = 20
    e2 = jax.random.normal(ke2, (batch2, embedding), dtype=jnp.float32)
    out2 = jax.block_until_ready(prober_forward(e2, w_prep, b_prep, out_dim))
    ref2 = prober_reference(e2, weights, biases)
    assert out2.shape == (batch2, out_dim)
    np.testing.assert_allclose(np.asarray(out2), np.asarray(ref2), rtol=3e-2, atol=3e-2)

    print("KERNEL_OK")
</pallas_src>

<mosaic_0001>
module attributes {stable_mosaic.version = 11 : i64} {
  func.func @kernel(%arg0: i32, %arg1: memref<128x32xf32, #tpu.memory_space<vmem>>, %arg2: memref<32x128xbf16, #tpu.memory_space<vmem>>, %arg3: memref<1x128xf32, #tpu.memory_space<vmem>>, %arg4: memref<128x128xbf16, #tpu.memory_space<vmem>>, %arg5: memref<1x128xf32, #tpu.memory_space<vmem>>, %arg6: memref<128x128xbf16, #tpu.memory_space<vmem>>, %arg7: memref<1x128xf32, #tpu.memory_space<vmem>>, %arg8: memref<128x128xf32, #tpu.memory_space<vmem>>) attributes {dimension_semantics = [#tpu.dimension_semantics<parallel>], iteration_bounds = array<i64: 2>, scalar_prefetch = 0 : i64, scratch_operands = 0 : i64, tpu.core_type = #tpu.core_type<tc>, window_params = [{transform_indices = @transform_0, window_bounds = array<i64: 128, 32>}, {pipeline_mode = #tpu.pipeline_mode<synchronous>, transform_indices = @transform_1, window_bounds = array<i64: 32, 128>}, {pipeline_mode = #tpu.pipeline_mode<synchronous>, transform_indices = @transform_2, window_bounds = array<i64: 1, 128>}, {pipeline_mode = #tpu.pipeline_mode<synchronous>, transform_indices = @transform_3, window_bounds = array<i64: 128, 128>}, {pipeline_mode = #tpu.pipeline_mode<synchronous>, transform_indices = @transform_4, window_bounds = array<i64: 1, 128>}, {pipeline_mode = #tpu.pipeline_mode<synchronous>, transform_indices = @transform_5, window_bounds = array<i64: 128, 128>}, {pipeline_mode = #tpu.pipeline_mode<synchronous>, transform_indices = @transform_6, window_bounds = array<i64: 1, 128>}, {transform_indices = @transform_7, window_bounds = array<i64: 128, 128>}]} {
    %c0 = arith.constant 0 : index
    %c0_0 = arith.constant 0 : index
    %0 = vector.load %arg1[%c0, %c0_0] : memref<128x32xf32, #tpu.memory_space<vmem>>, vector<128x32xf32>
    %1 = arith.truncf %0 : vector<128x32xf32> to vector<128x32xbf16>
    %c0_1 = arith.constant 0 : index
    %c0_2 = arith.constant 0 : index
    %2 = vector.load %arg2[%c0_1, %c0_2] : memref<32x128xbf16, #tpu.memory_space<vmem>>, vector<32x128xbf16>
    %c0_3 = arith.constant 0 : index
    %c0_4 = arith.constant 0 : index
    %3 = vector.load %arg3[%c0_3, %c0_4] : memref<1x128xf32, #tpu.memory_space<vmem>>, vector<1x128xf32>
    %cst = arith.constant dense<0.000000e+00> : vector<128x128xf32>
    %4 = tpu.matmul %1, %2, %cst {dimension_numbers = #tpu.dot_dimension_numbers<[1], [0], [0], [1], [0, 0, 1, 1], [], []>} : vector<128x32xbf16>, vector<32x128xbf16>, vector<128x128xf32> -> vector<128x128xf32>
    %5 = vector.broadcast %3 : vector<1x128xf32> to vector<128x128xf32>
    %6 = arith.addf %4, %5 : vector<128x128xf32>
    %cst_5 = arith.constant 0.000000e+00 : f32
    %7 = vector.broadcast %cst_5 : f32 to vector<128x128xf32>
    %8 = arith.maximumf %6, %7 : vector<128x128xf32>
    %9 = arith.truncf %8 : vector<128x128xf32> to vector<128x128xbf16>
    %c0_6 = arith.constant 0 : index
    %c0_7 = arith.constant 0 : index
    %10 = vector.load %arg4[%c0_6, %c0_7] : memref<128x128xbf16, #tpu.memory_space<vmem>>, vector<128x128xbf16>
    %c0_8 = arith.constant 0 : index
    %c0_9 = arith.constant 0 : index
    %11 = vector.load %arg5[%c0_8, %c0_9] : memref<1x128xf32, #tpu.memory_space<vmem>>, vector<1x128xf32>
    %cst_10 = arith.constant dense<0.000000e+00> : vector<128x128xf32>
    %12 = tpu.matmul %9, %10, %cst_10 {dimension_numbers = #tpu.dot_dimension_numbers<[1], [0], [0], [1], [0, 0, 1, 1], [], []>} : vector<128x128xbf16>, vector<128x128xbf16>, vector<128x128xf32> -> vector<128x128xf32>
    %13 = vector.broadcast %11 : vector<1x128xf32> to vector<128x128xf32>
    %14 = arith.addf %12, %13 : vector<128x128xf32>
    %cst_11 = arith.constant 0.000000e+00 : f32
    %15 = vector.broadcast %cst_11 : f32 to vector<128x128xf32>
    %16 = arith.maximumf %14, %15 : vector<128x128xf32>
    %17 = arith.truncf %16 : vector<128x128xf32> to vector<128x128xbf16>
    %c0_12 = arith.constant 0 : index
    %c0_13 = arith.constant 0 : index
    %18 = vector.load %arg6[%c0_12, %c0_13] : memref<128x128xbf16, #tpu.memory_space<vmem>>, vector<128x128xbf16>
    %c0_14 = arith.constant 0 : index
    %c0_15 = arith.constant 0 : index
    %19 = vector.load %arg7[%c0_14, %c0_15] : memref<1x128xf32, #tpu.memory_space<vmem>>, vector<1x128xf32>
    %cst_16 = arith.constant dense<0.000000e+00> : vector<128x128xf32>
    %20 = tpu.matmul %17, %18, %cst_16 {dimension_numbers = #tpu.dot_dimension_numbers<[1], [0], [0], [1], [0, 0, 1, 1], [], []>} : vector<128x128xbf16>, vector<128x128xbf16>, vector<128x128xf32> -> vector<128x128xf32>
    %21 = vector.broadcast %19 : vector<1x128xf32> to vector<128x128xf32>
    %22 = arith.addf %20, %21 : vector<128x128xf32>
    %c0_17 = arith.constant 0 : index
    %c0_18 = arith.constant 0 : index
    %23 = vector.load %arg8[%c0_17, %c0_18] : memref<128x128xf32, #tpu.memory_space<vmem>>, vector<128x128xf32>
    tpu.vector_store %arg8[%c0_17, %c0_18], %22 {strides = array<i32>} : memref<128x128xf32, #tpu.memory_space<vmem>>, vector<128x128xf32>,
    return
  }
  func.func @transform_0(%arg0: i32) -> (i32, i32) {
    %c0_i32 = arith.constant 0 : i32
    %c0_i32_0 = arith.constant 0 : i32
    return %arg0, %c0_i32 : i32, i32
  }
  func.func @transform_1(%arg0: i32) -> (i32, i32) {
    %c0_i32 = arith.constant 0 : i32
    %c0_i32_0 = arith.constant 0 : i32
    %c0_i32_1 = arith.constant 0 : i32
    return %c0_i32, %c0_i32_0 : i32, i32
  }
  func.func @transform_2(%arg0: i32) -> (i32, i32) {
    %c0_i32 = arith.constant 0 : i32
    %c0_i32_0 = arith.constant 0 : i32
    %c0_i32_1 = arith.constant 0 : i32
    return %c0_i32, %c0_i32_0 : i32, i32
  }
  func.func @transform_3(%arg0: i32) -> (i32, i32) {
    %c0_i32 = arith.constant 0 : i32
    %c0_i32_0 = arith.constant 0 : i32
    %c0_i32_1 = arith.constant 0 : i32
    return %c0_i32, %c0_i32_0 : i32, i32
  }
  func.func @transform_4(%arg0: i32) -> (i32, i32) {
    %c0_i32 = arith.constant 0 : i32
    %c0_i32_0 = arith.constant 0 : i32
    %c0_i32_1 = arith.constant 0 : i32
    return %c0_i32, %c0_i32_0 : i32, i32
  }
  func.func @transform_5(%arg0: i32) -> (i32, i32) {
    %c0_i32 = arith.constant 0 : i32
    %c0_i32_0 = arith.constant 0 : i32
    %c0_i32_1 = arith.constant 0 : i32
    return %c0_i32, %c0_i32_0 : i32, i32
  }
  func.func @transform_6(%arg0: i32) -> (i32, i32) {
    %c0_i32 = arith.constant 0 : i32
    %c0_i32_0 = arith.constant 0 : i32
    %c0_i32_1 = arith.constant 0 : i32
    return %c0_i32, %c0_i32_0 : i32, i32
  }
  func.func @transform_7(%arg0: i32) -> (i32, i32) {
    %c0_i32 = arith.constant 0 : i32
    %c0_i32_0 = arith.constant 0 : i32
    return %arg0, %c0_i32 : i32, i32
  }
}

</mosaic_0001>

<llo_original>
// kernel: tpu_custom_call.1
$region0: #{tpu_custom_call.1}
  #allocation0 [shape = 'u32[]', space=smem, size = 0x4, offset = 0x4, fixed_abs, tag = 'smem constant byte address 0x4 - core index']
  #allocation1 [shape = 'u32[72,128]{1,0:T(1,128)}', space=vmem, size = 0x9000, scoped, tag = 'internal scratch']
  %s0 = inlined_call_operand.vmem [shape: f32[256,32], index: 0, kind: input, shape index: {}]
  %s1 = inlined_call_operand.vmem [shape: bf16[32,128], index: 1, kind: input, shape index: {}]
  %s2 = inlined_call_operand.vmem [shape: f32[1,128], index: 2, kind: input, shape index: {}]
  %s3 = inlined_call_operand.vmem [shape: bf16[128,128], index: 3, kind: input, shape index: {}]
  %s4 = inlined_call_operand.vmem [shape: f32[1,128], index: 4, kind: input, shape index: {}]
  %s5 = inlined_call_operand.vmem [shape: bf16[128,128], index: 5, kind: input, shape index: {}]
  %s6 = inlined_call_operand.vmem [shape: f32[1,128], index: 6, kind: input, shape index: {}]
  %s7 = inlined_call_operand.hbm [shape: f32[256,128], index: 7, kind: output, shape index: {}]
  %s8 = sld [smem:[#allocation0]]
  $region61: #{tpu_custom_call.1} parent=0
    _
  %s10 = ssub.s32 1, %s8
  %s11 = scalar_select 0, %s10, %s8
  $region1: #{tpu_custom_call.1} parent=0
    #allocation2 [shape = 'u8[131072]{0}', space=vmem, size = 0x20000, scoped, tag = 'output window, operand 0']
    #allocation3 [shape = 's32[2]{0}', space=sflag, size = 0x8, scoped, tag = 'scoped memory for tpu_custom_call.1']
    %12 = vsyncpa [#allocation3], 0
    %s13 = scalar_lea.sflag [#allocation3], 1
    %14 = vsyncpa %s13, 0
    loop: start=0, step=1, limit=4
    $region2: #{tpu_custom_call.1} parent=1 // loop_pre_header
      _
    $region3: #{tpu_custom_call.1} parent=1 // loop_header
      %s16 = sphi 0, %s20
      %p17 = scmp.ge.s32.totalorder %s16, 4
      %s26 = sphi 0, %s28
      %s29 = sphi 0, %s26
      %s30 = sphi 0, %s29
      %s46 = sphi 0, %s30
      %s50 = sphi 0, %s50
      %s52 = sphi 0, %s50
      %s53 = sphi 0, %s52
      %s67 = sphi 0, %s53
      %s71 = sphi 0, %s71
      %s73 = sphi 0, %s71
      %s74 = sphi 0, %s73
      %s88 = sphi 0, %s74
      %s92 = sphi 0, %s92
      %s94 = sphi 0, %s92
      %s95 = sphi 0, %s94
      %s109 = sphi 0, %s95
      %s113 = sphi 0, %s113
      %s115 = sphi 0, %s113
      %s116 = sphi 0, %s115
      %s130 = sphi 0, %s116
      %s134 = sphi 0, %s134
      %s136 = sphi 0, %s134
      %s137 = sphi 0, %s136
      %s151 = sphi 0, %s137
      %s155 = sphi 0, %s155
      %s157 = sphi 0, %s155
      %s158 = sphi 0, %s157
      %s172 = sphi 0, %s158
      %s178 = sphi 0, %s180
      %s181 = sphi 0, %s178
      %s182 = sphi 0, %s181
      %s198 = sphi 0, %s182
    $region4: #{tpu_custom_call.1} parent=1 // loop_header_branch
      %19 = sbr.rel (%p17) target = $region8
    $region5: #{tpu_custom_call.1} parent=1 // loop_body
      %s21 = ssub.s32 %s16, 1
      %s22 = ssub.s32 %s16, 2
      %s23 = sadd.s32 %s16, 1
      %s24 = ssub.s32 %s16, %s23
      %p25 = scmp.eq.s32.totalorder %s24, 0
      %s27 = sadd.s32 %s26, 1
      %s28 = scalar_select %p25, %s26, %s27
      %p31 = pneg %p25
      %p32 = scmp.eq.s32.totalorder %s16, 1
      %p33 = por %p31, %p32
      %p34 = scmp.ne.s32.totalorder %s26, %s29
      %p35 = scmp.eq.s32.totalorder %s16, 0
      %p36 = por %p34, %p35
      %p37 = scmp.ne.s32.totalorder %s26, %s29
      %p38 = scmp.eq.s32.totalorder %s21, 1
      %p39 = por %p37, %p38
      %p40 = scmp.ne.s32.totalorder %s29, %s30
      %p41 = scmp.eq.s32.totalorder %s21, 0
      %p42 = por %p40, %p41
      %p43 = scmp.ne.s32.totalorder %s29, %s30
      %p44 = scmp.eq.s32.totalorder %s22, 1
      %p45 = por %p43, %p44
      %p47 = scmp.ne.s32.totalorder %s30, %s46
      %p48 = scmp.eq.s32.totalorder %s22, 0
      %p49 = por %p47, %p48
      %s51 = sadd.s32 %s50, 1
      %p54 = scmp.eq.s32.totalorder %s16, 1
      %p55 = scmp.ne.s32.totalorder %s50, %s52
      %p56 = scmp.eq.s32.totalorder %s16, 0
      %p57 = por %p55, %p56
      %p58 = scmp.ne.s32.totalorder %s50, %s52
      %p59 = scmp.eq.s32.totalorder %s21, 1
      %p60 = por %p58, %p59
      %p61 = scmp.ne.s32.totalorder %s52, %s53
      %p62 = scmp.eq.s32.totalorder %s21, 0
      %p63 = por %p61, %p62
      %p64 = scmp.ne.s32.totalorder %s52, %s53
      %p65 = scmp.eq.s32.totalorder %s22, 1
      %p66 = por %p64, %p65
      %p68 = scmp.ne.s32.totalorder %s53, %s67
      %p69 = scmp.eq.s32.totalorder %s22, 0
      %p70 = por %p68, %p69
      %s72 = sadd.s32 %s71, 1
      %p75 = scmp.eq.s32.totalorder %s16, 1
      %p76 = scmp.ne.s32.totalorder %s71, %s73
      %p77 = scmp.eq.s32.totalorder %s16, 0
      %p78 = por %p76, %p77
      %p79 = scmp.ne.s32.totalorder %s71, %s73
      %p80 = scmp.eq.s32.totalorder %s21, 1
      %p81 = por %p79, %p80
      %p82 = scmp.ne.s32.totalorder %s73, %s74
      %p83 = scmp.eq.s32.totalorder %s21, 0
      %p84 = por %p82, %p83
      %p85 = scmp.ne.s32.totalorder %s73, %s74
      %p86 = scmp.eq.s32.totalorder %s22, 1
      %p87 = por %p85, %p86
      %p89 = scmp.ne.s32.totalorder %s74, %s88
      %p90 = scmp.eq.s32.totalorder %s22, 0
      %p91 = por %p89, %p90
      %s93 = sadd.s32 %s92, 1
      %p96 = scmp.eq.s32.totalorder %s16, 1
      %p97 = scmp.ne.s32.totalorder %s92, %s94
      %p98 = scmp.eq.s32.totalorder %s16, 0
      %p99 = por %p97, %p98
      %p100 = scmp.ne.s32.totalorder %s92, %s94
      %p101 = scmp.eq.s32.totalorder %s21, 1
      %p102 = por %p100, %p101
      %p103 = scmp.ne.s32.totalorder %s94, %s95
      %p104 = scmp.eq.s32.totalorder %s21, 0
      %p105 = por %p103, %p104
      %p106 = scmp.ne.s32.totalorder %s94, %s95
      %p107 = scmp.eq.s32.totalorder %s22, 1
      %p108 = por %p106, %p107
      %p110 = scmp.ne.s32.totalorder %s95, %s109
      %p111 = scmp.eq.s32.totalorder %s22, 0
      %p112 = por %p110, %p111
      %s114 = sadd.s32 %s113, 1
      %p117 = scmp.eq.s32.totalorder %s16, 1
      %p118 = scmp.ne.s32.totalorder %s113, %s115
      %p119 = scmp.eq.s32.totalorder %s16, 0
      %p120 = por %p118, %p119
      %p121 = scmp.ne.s32.totalorder %s113, %s115
      %p122 = scmp.eq.s32.totalorder %s21, 1
      %p123 = por %p121, %p122
      %p124 = scmp.ne.s32.totalorder %s115, %s116
      %p125 = scmp.eq.s32.totalorder %s21, 0
      %p126 = por %p124, %p125
      %p127 = scmp.ne.s32.totalorder %s115, %s116
      %p128 = scmp.eq.s32.totalorder %s22, 1
      %p129 = por %p127, %p128
      %p131 = scmp.ne.s32.totalorder %s116, %s130
      %p132 = scmp.eq.s32.totalorder %s22, 0
      %p133 = por %p131, %p132
      %s135 = sadd.s32 %s134, 1
      %p138 = scmp.eq.s32.totalorder %s16, 1
      %p139 = scmp.ne.s32.totalorder %s134, %s136
      %p140 = scmp.eq.s32.totalorder %s16, 0
      %p141 = por %p139, %p140
      %p142 = scmp.ne.s32.totalorder %s134, %s136
      %p143 = scmp.eq.s32.totalorder %s21, 1
      %p144 = por %p142, %p143
      %p145 = scmp.ne.s32.totalorder %s136, %s137
      %p146 = scmp.eq.s32.totalorder %s21, 0
      %p147 = por %p145, %p146
      %p148 = scmp.ne.s32.totalorder %s136, %s137
      %p149 = scmp.eq.s32.totalorder %s22, 1
      %p150 = por %p148, %p149
      %p152 = scmp.ne.s32.totalorder %s137, %s151
      %p153 = scmp.eq.s32.totalorder %s22, 0
      %p154 = por %p152, %p153
      %s156 = sadd.s32 %s155, 1
      %p159 = scmp.eq.s32.totalorder %s16, 1
      %p160 = scmp.ne.s32.totalorder %s155, %s157
      %p161 = scmp.eq.s32.totalorder %s16, 0
      %p162 = por %p160, %p161
      %p163 = scmp.ne.s32.totalorder %s155, %s157
      %p164 = scmp.eq.s32.totalorder %s21, 1
      %p165 = por %p163, %p164
      %p166 = scmp.ne.s32.totalorder %s157, %s158
      %p167 = scmp.eq.s32.totalorder %s21, 0
      %p168 = por %p166, %p167
      %p169 = scmp.ne.s32.totalorder %s157, %s158
      %p170 = scmp.eq.s32.totalorder %s22, 1
      %p171 = por %p169, %p170
      %p173 = scmp.ne.s32.totalorder %s158, %s172
      %p174 = scmp.eq.s32.totalorder %s22, 0
      %p175 = por %p173, %p174
      %s176 = ssub.s32 %s16, %s23
      %p177 = scmp.eq.s32.totalorder %s176, 0
      %s179 = sadd.s32 %s178, 1
      %s180 = scalar_select %p177, %s178, %s179
      %p183 = pneg %p177
      %p184 = scmp.eq.s32.totalorder %s16, 1
      %p185 = por %p183, %p184
      %p186 = scmp.ne.s32.totalorder %s178, %s181
      %p187 = scmp.eq.s32.totalorder %s16, 0
      %p188 = por %p186, %p187
      %p189 = scmp.ne.s32.totalorder %s178, %s181
      %p190 = scmp.eq.s32.totalorder %s21, 1
      %p191 = por %p189, %p190
      %p192 = scmp.ne.s32.totalorder %s181, %s182
      %p193 = scmp.eq.s32.totalorder %s21, 0
      %p194 = por %p192, %p193
      %p195 = scmp.ne.s32.totalorder %s181, %s182
      %p196 = scmp.eq.s32.totalorder %s22, 1
      %p197 = por %p195, %p196
      %p199 = scmp.ne.s32.totalorder %s182, %s198
      %p200 = scmp.eq.s32.totalorder %s22, 0
      %p201 = por %p199, %p200
      %p202 = scmp.le.s32.totalorder 1, %s16
      %p203 = scmp.lt.s32.totalorder %s16, 3
      %p204 = pnand %p202, %p203
      %p205 = pneg %p204
      // Predicated region
      $region9: #{tpu_custom_call.1} parent=5 // pred_check
        _
      $region10: #{tpu_custom_call.1} parent=5 // pred_check_branch
        %207 = sbr.rel (%p204) target = $region12
      $region11: #{tpu_custom_call.1} parent=5 // pred_region
        %s208 = ssub.s32 %s16, 1
        // Predicated region
        $region13: #{tpu_custom_call.1} parent=11 // pred_check
          %p209 = pneg %p63
        $region14: #{tpu_custom_call.1} parent=11 // pred_check_branch
          %211 = sbr.rel (%p209) target = $region16
        $region15: #{tpu_custom_call.1} parent=11 // pred_region
          _
        $region16: #{tpu_custom_call.1} parent=11 // pred_fallthru
          _
        // Predicated region
        $region17: #{tpu_custom_call.1} parent=11 // pred_check
          %p212 = pneg %p84
        $region18: #{tpu_custom_call.1} parent=11 // pred_check_branch
          %214 = sbr.rel (%p212) target = $region20
        $region19: #{tpu_custom_call.1} parent=11 // pred_region
          _
        $region20: #{tpu_custom_call.1} parent=11 // pred_fallthru
          _
        // Predicated region
        $region21: #{tpu_custom_call.1} parent=11 // pred_check
          %p215 = pneg %p105
        $region22: #{tpu_custom_call.1} parent=11 // pred_check_branch
          %217 = sbr.rel (%p215) target = $region24
        $region23: #{tpu_custom_call.1} parent=11 // pred_region
          _
        $region24: #{tpu_custom_call.1} parent=11 // pred_fallthru
          _
        // Predicated region
        $region25: #{tpu_custom_call.1} parent=11 // pred_check
          %p218 = pneg %p126
        $region26: #{tpu_custom_call.1} parent=11 // pred_check_branch
          %220 = sbr.rel (%p218) target = $region28
        $region27: #{tpu_custom_call.1} parent=11 // pred_region
          _
        $region28: #{tpu_custom_call.1} parent=11 // pred_fallthru
          _
        // Predicated region
        $region29: #{tpu_custom_call.1} parent=11 // pred_check
          %p221 = pneg %p147
        $region30: #{tpu_custom_call.1} parent=11 // pred_check_branch
          %223 = sbr.rel (%p221) target = $region32
        $region31: #{tpu_custom_call.1} parent=11 // pred_region
          _
        $region32: #{tpu_custom_call.1} parent=11 // pred_fallthru
          _
        // Predicated region
        $region33: #{tpu_custom_call.1} parent=11 // pred_check
          %p224 = pneg %p168
        $region34: #{tpu_custom_call.1} parent=11 // pred_check_branch
          %226 = sbr.rel (%p224) target = $region36
        $region35: #{tpu_custom_call.1} parent=11 // pred_region
          _
        $region36: #{tpu_custom_call.1} parent=11 // pred_fallthru
          _
      $region12: #{tpu_custom_call.1} parent=5 // pred_fallthru
        _
      %p227 = scmp.lt.s32.totalorder %s16, 2
      // Predicated region
      $region37: #{tpu_custom_call.1} parent=5 // pred_check
        %p228 = pneg %p227
      $region38: #{tpu_custom_call.1} parent=5 // pred_check_branch
        %230 = sbr.rel (%p228) target = $region40
      $region39: #{tpu_custom_call.1} parent=5 // pred_region
        // Predicated region
        $region41: #{tpu_custom_call.1} parent=39 // pred_check
          %p231 = pneg %p36
        $region42: #{tpu_custom_call.1} parent=39 // pred_check_branch
          %233 = sbr.rel (%p231) target = $region44
        $region43: #{tpu_custom_call.1} parent=39 // pred_region
          %s234 = smul.u32 16, %s16
          %p235 = scmp.lt.s32.totalorder %s234, 31
          %s236 = scalar_select %p235, %s234, 31
          %s237 = smul.addr %s236, 8
          %s238 = scalar_lea.vmem %s0, %s237
          %s239 = smul.u32 16, %s16
        $region44: #{tpu_custom_call.1} parent=39 // pred_fallthru
          _
      $region40: #{tpu_custom_call.1} parent=5 // pred_fallthru
        _
      %p240 = scmp.le.s32.totalorder 1, %s16
      %p241 = scmp.lt.s32.totalorder %s16, 3
      %p242 = pnand %p240, %p241
      %p243 = pneg %p242
      // Predicated region
      $region45: #{tpu_custom_call.1} parent=5 // pred_check
        _
      $region46: #{tpu_custom_call.1} parent=5 // pred_check_branch
        %245 = sbr.rel (%p242) target = $region48
      $region47: #{tpu_custom_call.1} parent=5 // pred_region
        %s246 = ssub.s32 %s16, 1
        %s247 = smul.u32 16, %s21
        %p248 = scmp.lt.s32.totalorder %s247, 31
        %s249 = scalar_select %p248, %s247, 31
        %s250 = smul.addr %s249, 8
        %s251 = scalar_lea.vmem %s0, %s250
        %p252 = pneg %p42
        %p253 = pneg %p39
        %p254 = pneg %p63
        %p255 = pneg %p60
        %p256 = pneg %p84
        %p257 = pneg %p81
        %p258 = pneg %p105
        %p259 = pneg %p102
        %p260 = pneg %p126
        %p261 = pneg %p123
        %p262 = pneg %p147
        %p263 = pneg %p144
        %p264 = pneg %p168
        %p265 = pneg %p165
        %p266 = pneg %p194
        %p267 = pneg %p191
        %s268 = sand.u32 %s181, 1
        %s269 = scalar_lea.sflag [#allocation3], %s268
        %s270 = sand.u32 %s181, 1
        %s271 = smul.addr %s270, 128
        %s272 = scalar_lea.vmem [#allocation2], %s271
        %s273 = smul.u32 16, %s21
        %p274 = scmp.lt.s32.totalorder %s273, 31
        %s275 = scalar_select %p274, %s273, 31
        %s276 = smul.addr %s275, 8
        %s277 = scalar_lea.vmem %s0, %s276
        %s278 = smul.u32 16, %s21
        %s279 = smul.u32 16, %s21
        %v281 = vld [vmem:[%s277] sm:$0xff]
        %v282 = vld [vmem:[%s277 + $0x8] sm:$0xff]
        %v283 = vld [vmem:[%s277 + $0x10] sm:$0xff]
        %v284 = vld [vmem:[%s277 + $0x18] sm:$0xff]
        %v285 = vld [vmem:[%s277 + $0x20] sm:$0xff]
        %v286 = vld [vmem:[%s277 + $0x28] sm:$0xff]
        %v287 = vld [vmem:[%s277 + $0x30] sm:$0xff]
        %v288 = vld [vmem:[%s277 + $0x38] sm:$0xff]
        %v289 = vld [vmem:[%s277 + $0x40] sm:$0xff]
        %v290 = vld [vmem:[%s277 + $0x48] sm:$0xff]
        %v291 = vld [vmem:[%s277 + $0x50] sm:$0xff]
        %v292 = vld [vmem:[%s277 + $0x58] sm:$0xff]
        %v293 = vld [vmem:[%s277 + $0x60] sm:$0xff]
        %v294 = vld [vmem:[%s277 + $0x68] sm:$0xff]
        %v295 = vld [vmem:[%s277 + $0x70] sm:$0xff]
        %v296 = vld [vmem:[%s277 + $0x78] sm:$0xff]
        %v297 = vpack.c.bf16 %v282, %v281
        %v298 = vpack.c.bf16 %v284, %v283
        %v299 = vpack.c.bf16 %v286, %v285
        %v300 = vpack.c.bf16 %v288, %v287
        %v301 = vpack.c.bf16 %v290, %v289
        %v302 = vpack.c.bf16 %v292, %v291
        %v303 = vpack.c.bf16 %v294, %v293
        %v304 = vpack.c.bf16 %v296, %v295
        %v305 = vld [vmem:[%s1] sm:$0xf]
        %v306 = vld [vmem:[%s1 + $0x4] sm:$0xf]
        %v307 = vld [vmem:[%s1 + $0x8] sm:$0xf]
        %v308 = vld [vmem:[%s1 + $0xc] sm:$0xf]
        %v309 = vld [vmem:[%s2] sm:$0x1]
        %v311 = vperm.slane %v309, 0
        %v317 = vunpack.c.l.b16 %v305
        %v318 = vunpack.c.l.b16 %v306
        %v319 = vunpack.c.l.b16 %v307
        %v320 = vunpack.c.l.b16 %v308
        %v321 = vpack.c.b16 %v318, %v317
        %v322 = vpack.c.b16 %v320, %v319
        %vm325 = vcmask 261120
        %v327 = vsel %vm325, %v297, 0
        %v330 = vsel %vm325, %v298, 0
        %v333 = vsel %vm325, %v299, 0
        %v336 = vsel %vm325, %v300, 0
        %v339 = vsel %vm325, %v301, 0
        %v342 = vsel %vm325, %v302, 0
        %v345 = vsel %vm325, %v303, 0
        %v348 = vsel %vm325, %v304, 0
        %350 = vmatpush.bf16.msra.mxu0 0
        %351 = vmatpush.bf16.msra.mxu0 0
        %352 = vmatpush.bf16.msra.mxu0 0
        %353 = vmatpush.bf16.msra.mxu0 0
        %354 = vmatpush.bf16.msra.mxu0 0
        %355 = vmatpush.bf16.msra.mxu0 0
        %356 = vmatpush.bf16.msra.mxu0 %v322
        %357 = vmatpush.bf16.msra.mxu0 %v321
        %358 = vmatmul.bf16.gmra.mxu0 %v327
        %v359 = vpop.f32.mrf.mxu0
        %v360 = vadd.f32 %v311, %v359
        %v361 = vpop.f32.mrf.mxu0
        %v362 = vadd.f32 %v311, %v361
        %363 = vmatmul.bf16.gmra.mxu0 %v330
        %v364 = vpop.f32.mrf.mxu0
        %v365 = vadd.f32 %v311, %v364
        %v366 = vpop.f32.mrf.mxu0
        %v367 = vadd.f32 %v311, %v366
        %368 = vmatmul.bf16.gmra.mxu0 %v333
        %v369 = vpop.f32.mrf.mxu0
        %v370 = vadd.f32 %v311, %v369
        %v371 = vpop.f32.mrf.mxu0
        %v372 = vadd.f32 %v311, %v371
        %373 = vmatmul.bf16.gmra.mxu0 %v336
        %v374 = vpop.f32.mrf.mxu0
        %v375 = vadd.f32 %v311, %v374
        %v376 = vpop.f32.mrf.mxu0
        %v377 = vadd.f32 %v311, %v376
        %378 = vmatmul.bf16.gmra.mxu0 %v339
        %v379 = vpop.f32.mrf.mxu0
        %v380 = vadd.f32 %v311, %v379
        %v381 = vpop.f32.mrf.mxu0
        %v382 = vadd.f32 %v311, %v381
        %383 = vmatmul.bf16.gmra.mxu0 %v342
        %v384 = vpop.f32.mrf.mxu0
        %v385 = vadd.f32 %v311, %v384
        %v386 = vpop.f32.mrf.mxu0
        %v387 = vadd.f32 %v311, %v386
        %388 = vmatmul.bf16.gmra.mxu0 %v345
        %v389 = vpop.f32.mrf.mxu0
        %v390 = vadd.f32 %v311, %v389
        %v391 = vpop.f32.mrf.mxu0
        %v392 = vadd.f32 %v311, %v391
        %393 = vmatmul.bf16.gmra.mxu0 %v348
        %v394 = vpop.f32.mrf.mxu0
        %v395 = vadd.f32 %v311, %v394
        %v396 = vpop.f32.mrf.mxu0
        %v397 = vadd.f32 %v311, %v396
        %398 = vdwg.mxu0
        %v399 = vmax.f32 %v360, 0.0
        %v400 = vmax.f32 %v362, 0.0
        %v401 = vmax.f32 %v365, 0.0
        %v402 = vmax.f32 %v367, 0.0
        %v403 = vmax.f32 %v370, 0.0
        %v404 = vmax.f32 %v372, 0.0
        %v405 = vmax.f32 %v375, 0.0
        %v406 = vmax.f32 %v377, 0.0
        %v407 = vmax.f32 %v380, 0.0
        %v408 = vmax.f32 %v382, 0.0
        %v409 = vmax.f32 %v385, 0.0
        %v410 = vmax.f32 %v387, 0.0
        %v411 = vmax.f32 %v390, 0.0
        %v412 = vmax.f32 %v392, 0.0
        %v413 = vmax.f32 %v395, 0.0
        %v414 = vmax.f32 %v397, 0.0
        %v415 = vpack.c.bf16 %v400, %v399
        %v416 = vpack.c.bf16 %v402, %v401
        %v417 = vpack.c.bf16 %v404, %v403
        %v418 = vpack.c.bf16 %v406, %v405
        %v419 = vpack.c.bf16 %v408, %v407
        %v420 = vpack.c.bf16 %v410, %v409
        %v421 = vpack.c.bf16 %v412, %v411
        %v422 = vpack.c.bf16 %v414, %v413
        %v423 = vld [vmem:[%s3] sm:$0xf]
        %v424 = vld [vmem:[%s3 + $0x4] sm:$0xf]
        %v425 = vld [vmem:[%s3 + $0x8] sm:$0xf]
        %v426 = vld [vmem:[%s3 + $0xc] sm:$0xf]
        %v427 = vld [vmem:[%s3 + $0x10] sm:$0xf]
        %v428 = vld [vmem:[%s3 + $0x14] sm:$0xf]
        %v429 = vld [vmem:[%s3 + $0x18] sm:$0xf]
        %v430 = vld [vmem:[%s3 + $0x1c] sm:$0xf]
        %v431 = vld [vmem:[%s3 + $0x20] sm:$0xf]
        %v432 = vld [vmem:[%s3 + $0x24] sm:$0xf]
        %v433 = vld [vmem:[%s3 + $0x28] sm:$0xf]
        %v434 = vld [vmem:[%s3 + $0x2c] sm:$0xf]
        %v435 = vld [vmem:[%s3 + $0x30] sm:$0xf]
        %v436 = vld [vmem:[%s3 + $0x34] sm:$0xf]
        %v437 = vld [vmem:[%s3 + $0x38] sm:$0xf]
        %v438 = vld [vmem:[%s3 + $0x3c] sm:$0xf]
        %v439 = vld [vmem:[%s4] sm:$0x1]
        %v441 = vperm.slane %v439, 0
        %v459 = vunpack.c.l.b16 %v423
        %v460 = vunpack.c.l.b16 %v424
        %v461 = vunpack.c.l.b16 %v425
        %v462 = vunpack.c.l.b16 %v426
        %v463 = vunpack.c.l.b16 %v427
        %v464 = vunpack.c.l.b16 %v428
        %v465 = vunpack.c.l.b16 %v429
        %v466 = vunpack.c.l.b16 %v430
        %v467 = vunpack.c.l.b16 %v431
        %v468 = vunpack.c.l.b16 %v432
        %v469 = vunpack.c.l.b16 %v433
        %v470 = vunpack.c.l.b16 %v434
        %v471 = vunpack.c.l.b16 %v435
        %v472 = vunpack.c.l.b16 %v436
        %v473 = vunpack.c.l.b16 %v437
        %v474 = vunpack.c.l.b16 %v438
        %v475 = vpack.c.b16 %v460, %v459
        %v476 = vpack.c.b16 %v462, %v461
        %v477 = vpack.c.b16 %v464, %v463
        %v478 = vpack.c.b16 %v466, %v465
        %v479 = vpack.c.b16 %v468, %v467
        %v480 = vpack.c.b16 %v470, %v469
        %v481 = vpack.c.b16 %v472, %v471
        %v482 = vpack.c.b16 %v474, %v473
        %491 = vmatpush.bf16.msra.mxu0 %v482
        %492 = vmatpush.bf16.msra.mxu0 %v481
        %493 = vmatpush.bf16.msra.mxu0 %v480
        %494 = vmatpush.bf16.msra.mxu0 %v479
        %495 = vmatpush.bf16.msra.mxu0 %v478
        %496 = vmatpush.bf16.msra.mxu0 %v477
        %497 = vmatpush.bf16.msra.mxu0 %v476
        %498 = vmatpush.bf16.msra.mxu0 %v475
        %499 = vmatmul.bf16.gmra.mxu0 %v415
        %v500 = vpop.f32.mrf.mxu0
        %v501 = vadd.f32 %v441, %v500
        %v502 = vpop.f32.mrf.mxu0
        %v503 = vadd.f32 %v441, %v502
        %504 = vmatmul.bf16.gmra.mxu0 %v416
        %v505 = vpop.f32.mrf.mxu0
        %v506 = vadd.f32 %v441, %v505
        %v507 = vpop.f32.mrf.mxu0
        %v508 = vadd.f32 %v441, %v507
        %509 = vmatmul.bf16.gmra.mxu0 %v417
        %v510 = vpop.f32.mrf.mxu0
        %v511 = vadd.f32 %v441, %v510
        %v512 = vpop.f32.mrf.mxu0
        %v513 = vadd.f32 %v441, %v512
        %514 = vmatmul.bf16.gmra.mxu0 %v418
        %v515 = vpop.f32.mrf.mxu0
        %v516 = vadd.f32 %v441, %v515
        %v517 = vpop.f32.mrf.mxu0
        %v518 = vadd.f32 %v441, %v517
        %519 = vmatmul.bf16.gmra.mxu0 %v419
        %v520 = vpop.f32.mrf.mxu0
        %v521 = vadd.f32 %v441, %v520
        %v522 = vpop.f32.mrf.mxu0
        %v523 = vadd.f32 %v441, %v522
        %524 = vmatmul.bf16.gmra.mxu0 %v420
        %v525 = vpop.f32.mrf.mxu0
        %v526 = vadd.f32 %v441, %v525
        %v527 = vpop.f32.mrf.mxu0
        %v528 = vadd.f32 %v441, %v527
        %529 = vmatmul.bf16.gmra.mxu0 %v421
        %v530 = vpop.f32.mrf.mxu0
        %v531 = vadd.f32 %v441, %v530
        %v532 = vpop.f32.mrf.mxu0
        %v533 = vadd.f32 %v441, %v532
        %534 = vmatmul.bf16.gmra.mxu0 %v422
        %v535 = vpop.f32.mrf.mxu0
        %v536 = vadd.f32 %v441, %v535
        %v537 = vpop.f32.mrf.mxu0
        %v538 = vadd.f32 %v441, %v537
        %539 = vdwg.mxu0
        %v540 = vmax.f32 %v501, 0.0
        %v541 = vmax.f32 %v503, 0.0
        %v542 = vmax.f32 %v506, 0.0
        %v543 = vmax.f32 %v508, 0.0
        %v544 = vmax.f32 %v511, 0.0
        %v545 = vmax.f32 %v513, 0.0
        %v546 = vmax.f32 %v516, 0.0
        %v547 = vmax.f32 %v518, 0.0
        %v548 = vmax.f32 %v521, 0.0
        %v549 = vmax.f32 %v523, 0.0
        %v550 = vmax.f32 %v526, 0.0
        %v551 = vmax.f32 %v528, 0.0
        %v552 = vmax.f32 %v531, 0.0
        %v553 = vmax.f32 %v533, 0.0
        %v554 = vmax.f32 %v536, 0.0
        %v555 = vmax.f32 %v538, 0.0
        %v556 = vpack.c.bf16 %v541, %v540
        %v557 = vpack.c.bf16 %v543, %v542
        %v558 = vpack.c.bf16 %v545, %v544
        %v559 = vpack.c.bf16 %v547, %v546
        %v560 = vpack.c.bf16 %v549, %v548
        %v561 = vpack.c.bf16 %v551, %v550
        %v562 = vpack.c.bf16 %v553, %v552
        %v563 = vpack.c.bf16 %v555, %v554
        %v564 = vld [vmem:[%s5] sm:$0xf]
        %v565 = vld [vmem:[%s5 + $0x4] sm:$0xf]
        %v566 = vld [vmem:[%s5 + $0x8] sm:$0xf]
        %v567 = vld [vmem:[%s5 + $0xc] sm:$0xf]
        %v568 = vld [vmem:[%s5 + $0x10] sm:$0xf]
        %v569 = vld [vmem:[%s5 + $0x14] sm:$0xf]
        %v570 = vld [vmem:[%s5 + $0x18] sm:$0xf]
        %v571 = vld [vmem:[%s5 + $0x1c] sm:$0xf]
        %v572 = vld [vmem:[%s5 + $0x20] sm:$0xf]
        %v573 = vld [vmem:[%s5 + $0x24] sm:$0xf]
        %v574 = vld [vmem:[%s5 + $0x28] sm:$0xf]
        %v575 = vld [vmem:[%s5 + $0x2c] sm:$0xf]
        %v576 = vld [vmem:[%s5 + $0x30] sm:$0xf]
        %v577 = vld [vmem:[%s5 + $0x34] sm:$0xf]
        %v578 = vld [vmem:[%s5 + $0x38] sm:$0xf]
        %v579 = vld [vmem:[%s5 + $0x3c] sm:$0xf]
        %v580 = vld [vmem:[%s6] sm:$0x1]
        %v582 = vperm.slane %v580, 0
        %v600 = vunpack.c.l.b16 %v564
        %v601 = vunpack.c.l.b16 %v565
        %v602 = vunpack.c.l.b16 %v566
        %v603 = vunpack.c.l.b16 %v567
        %v604 = vunpack.c.l.b16 %v568
        %v605 = vunpack.c.l.b16 %v569
        %v606 = vunpack.c.l.b16 %v570
        %v607 = vunpack.c.l.b16 %v571
        %v608 = vunpack.c.l.b16 %v572
        %v609 = vunpack.c.l.b16 %v573
        %v610 = vunpack.c.l.b16 %v574
        %v611 = vunpack.c.l.b16 %v575
        %v612 = vunpack.c.l.b16 %v576
        %v613 = vunpack.c.l.b16 %v577
        %v614 = vunpack.c.l.b16 %v578
        %v615 = vunpack.c.l.b16 %v579
        %v616 = vpack.c.b16 %v601, %v600
        %v617 = vpack.c.b16 %v603, %v602
        %v618 = vpack.c.b16 %v605, %v604
        %v619 = vpack.c.b16 %v607, %v606
        %v620 = vpack.c.b16 %v609, %v608
        %v621 = vpack.c.b16 %v611, %v610
        %v622 = vpack.c.b16 %v613, %v612
        %v623 = vpack.c.b16 %v615, %v614
        %632 = vmatpush.bf16.msra.mxu0 %v623
        %633 = vmatpush.bf16.msra.mxu0 %v622
        %634 = vmatpush.bf16.msra.mxu0 %v621
        %635 = vmatpush.bf16.msra.mxu0 %v620
        %636 = vmatpush.bf16.msra.mxu0 %v619
        %637 = vmatpush.bf16.msra.mxu0 %v618
        %638 = vmatpush.bf16.msra.mxu0 %v617
        %639 = vmatpush.bf16.msra.mxu0 %v616
        %640 = vmatmul.bf16.gmra.mxu0 %v556
        %v641 = vpop.f32.mrf.mxu0
        %v642 = vadd.f32 %v582, %v641
        %v643 = vpop.f32.mrf.mxu0
        %v644 = vadd.f32 %v582, %v643
        %645 = vmatmul.bf16.gmra.mxu0 %v557
        %v646 = vpop.f32.mrf.mxu0
        %v647 = vadd.f32 %v582, %v646
        %v648 = vpop.f32.mrf.mxu0
        %v649 = vadd.f32 %v582, %v648
        %650 = vmatmul.bf16.gmra.mxu0 %v558
        %v651 = vpop.f32.mrf.mxu0
        %v652 = vadd.f32 %v582, %v651
        %v653 = vpop.f32.mrf.mxu0
        %v654 = vadd.f32 %v582, %v653
        %655 = vmatmul.bf16.gmra.mxu0 %v559
        %v656 = vpop.f32.mrf.mxu0
        %v657 = vadd.f32 %v582, %v656
        %v658 = vpop.f32.mrf.mxu0
        %v659 = vadd.f32 %v582, %v658
        %660 = vmatmul.bf16.gmra.mxu0 %v560
        %v661 = vpop.f32.mrf.mxu0
        %v662 = vadd.f32 %v582, %v661
        %v663 = vpop.f32.mrf.mxu0
        %v664 = vadd.f32 %v582, %v663
        %665 = vmatmul.bf16.gmra.mxu0 %v561
        %v666 = vpop.f32.mrf.mxu0
        %v667 = vadd.f32 %v582, %v666
        %v668 = vpop.f32.mrf.mxu0
        %v669 = vadd.f32 %v582, %v668
        %670 = vmatmul.bf16.gmra.mxu0 %v562
        %v671 = vpop.f32.mrf.mxu0
        %v672 = vadd.f32 %v582, %v671
        %v673 = vpop.f32.mrf.mxu0
        %v674 = vadd.f32 %v582, %v673
        %675 = vmatmul.bf16.gmra.mxu0 %v563
        %v676 = vpop.f32.mrf.mxu0
        %v677 = vadd.f32 %v582, %v676
        %v678 = vpop.f32.mrf.mxu0
        %v679 = vadd.f32 %v582, %v678
        %680 = vdwg.mxu0
        %681 = vst [vmem:[%s272] sm:$0xff] %v642
        %682 = vst [vmem:[%s272 + $0x8] sm:$0xff] %v644
        %683 = vst [vmem:[%s272 + $0x10] sm:$0xff] %v647
        %684 = vst [vmem:[%s272 + $0x18] sm:$0xff] %v649
        %685 = vst [vmem:[%s272 + $0x20] sm:$0xff] %v652
        %686 = vst [vmem:[%s272 + $0x28] sm:$0xff] %v654
        %687 = vst [vmem:[%s272 + $0x30] sm:$0xff] %v657
        %688 = vst [vmem:[%s272 + $0x38] sm:$0xff] %v659
        %689 = vst [vmem:[%s272 + $0x40] sm:$0xff] %v662
        %690 = vst [vmem:[%s272 + $0x48] sm:$0xff] %v664
        %691 = vst [vmem:[%s272 + $0x50] sm:$0xff] %v667
        %692 = vst [vmem:[%s272 + $0x58] sm:$0xff] %v669
        %693 = vst [vmem:[%s272 + $0x60] sm:$0xff] %v672
        %694 = vst [vmem:[%s272 + $0x68] sm:$0xff] %v674
        %695 = vst [vmem:[%s272 + $0x70] sm:$0xff] %v677
        %696 = vst [vmem:[%s272 + $0x78] sm:$0xff] %v679
        %s697 = sand.u32 %s181, 1
        %s698 = scalar_lea.sflag [#allocation3], %s697
        %s699 = sand.u32 %s181, 1
        %s700 = smul.addr %s699, 128
        %s701 = scalar_lea.vmem [#allocation2], %s700
        // Predicated region
        $region49: #{tpu_custom_call.1} parent=47 // pred_check
          %p702 = pneg %p191
        $region50: #{tpu_custom_call.1} parent=47 // pred_check_branch
          %704 = sbr.rel (%p702) target = $region52
        $region51: #{tpu_custom_call.1} parent=47 // pred_region
          %s705 = smul.u32 16, %s21
          %707 = vsyncadd %s698, 0
          %s708 = smul.addr %s705, 8
          %s709 = scalar_lea.hbm %s7, %s708
          %s710 = sshll.u32 %s701, 4
          %s711 = int_to_ptr.vmem [resolvable:$true] %s710
          %s712 = sshll.u32 %s709, 4
          %s713 = int_to_ptr.hbm [resolvable:$true] %s712
          %718 = dma.vmem_to_hbm [thread:$0]  %s711, 2048, %s713, %s698, 128, 128, 8
        $region52: #{tpu_custom_call.1} parent=47 // pred_fallthru
          _
      $region48: #{tpu_custom_call.1} parent=5 // pred_fallthru
        _
      %p719 = scmp.le.s32.totalorder 2, %s16
      // Predicated region
      $region53: #{tpu_custom_call.1} parent=5 // pred_check
        %p720 = pneg %p719
      $region54: #{tpu_custom_call.1} parent=5 // pred_check_branch
        %722 = sbr.rel (%p720) target = $region56
      $region55: #{tpu_custom_call.1} parent=5 // pred_region
        %s723 = ssub.s32 %s16, 2
        // Predicated region
        $region57: #{tpu_custom_call.1} parent=55 // pred_check
          %p724 = pneg %p197
        $region58: #{tpu_custom_call.1} parent=55 // pred_check_branch
          %726 = sbr.rel (%p724) target = $region60
        $region59: #{tpu_custom_call.1} parent=55 // pred_region
          %s727 = sand.u32 %s182, 1
          %s728 = scalar_lea.sflag [#allocation3], %s727
          %s729 = sand.u32 %s182, 1
          %s730 = smul.addr %s729, 128
          %s731 = scalar_lea.vmem [#allocation2], %s730
          %733 = dma.done %s728, 2048
        $region60: #{tpu_custom_call.1} parent=55 // pred_fallthru
          _
      $region56: #{tpu_custom_call.1} parent=5 // pred_fallthru
        _
    $region6: #{tpu_custom_call.1} parent=1 // loop_footer
      %s20 = sadd.s32 1, %s16
    $region7: #{tpu_custom_call.1} parent=1 // loop_footer_branch
      %15 = sbr.rel target = $region3
    $region8: #{tpu_custom_call.1} parent=1 // loop_exit
      _
    %734 = vsyncpa [#allocation3], 1
    %s735 = scalar_lea.sflag [#allocation3], 1
    %736 = vsyncpa %s735, 1

</llo_original>
